<compile_context>
chip_gen: v5e
topology: v5e:2x2
jax: 0.10.0
libtpu: 0.0.40
codegen_flags: <defaults>
</compile_context>

<pallas_src>
import functools

import jax
import jax.numpy as jnp
from jax.experimental import pallas as pl
from jax.experimental.pallas import tpu as pltpu

LANE = 128     # lane width of a vreg / lane-dense padding target
SUBLANE = 8    # sublane alignment for row offsets


def _rup(n, m):
    return -(-n // m) * m


def pack_params(w1, b1, w2, b2, w3, b3):
    """Pack all params into one (R, 128) f32 buffer, done ONCE at build time.

    Sections (rows padded so static in-kernel slices stay sublane aligned and
    contraction dims match the 128-wide activations; columns padded to 128):
      w1 (in, h1) -> (rup8(in), 128)
      b1 (1,  h1) -> (8,        128)
      w2 (h1, h2) -> (128,      128)
      b2 (1,  h2) -> (8,        128)
      w3 (h2, out)-> (128,      128)
      b3 (1,  out)-> (8,        128)
    Returns (packed, row_offsets).
    """
    h1, h2, out_size = w1.shape[1], w2.shape[1], w3.shape[1]
    assert max(w1.shape[0], h1, h2, out_size) <= LANE, (
        "single-lane-tile design assumes all feature dims <= 128")

    def section(a, rows):
        a = jnp.asarray(a, jnp.float32)
        return jnp.pad(a, ((0, rows - a.shape[0]), (0, LANE - a.shape[1])))

    parts = [
        section(w1, _rup(w1.shape[0], SUBLANE)),
        section(b1, SUBLANE),
        section(w2, LANE),      # contraction dim padded to activation width
        section(b2, SUBLANE),
        section(w3, LANE),      # contraction dim padded to activation width
        section(b3, SUBLANE),
    ]
    offsets, off = [], 0
    for p in parts:
        offsets.append(off)
        off += p.shape[0]
    return jnp.concatenate(parts, axis=0), tuple(offsets)


def xornet_kernel(x_ref, p_ref, o_ref, *, in_size, offs):
    r_w1, r_b1, r_w2, r_b2, r_w3, r_b3 = offs
    x = x_ref[...]                                    # (Bt, in_size)

    # ---- fc_1 + sigmoid : K = in_size contraction on the VPU (no MXU pass) --
    h = p_ref[r_b1:r_b1 + 1, :]                       # (1, 128) bias row
    for k in range(in_size):                          # statically unrolled
        h = h + x[:, k:k + 1] * p_ref[r_w1 + k:r_w1 + k + 1, :]
    h = jax.nn.sigmoid(h)                             # (Bt, 128)

    # ---- fc_2 + sigmoid : lane-dense MXU matmul (padded rows/cols are 0) ----
    w2 = p_ref[r_w2:r_w2 + LANE, :]                   # (128, 128)
    b2 = p_ref[r_b2:r_b2 + 1, :]                      # (1, 128)
    h = jax.nn.sigmoid(
        jnp.dot(h, w2, preferred_element_type=jnp.float32) + b2)

    # ---- fc_3 : lane-dense MXU matmul -> one unmasked (Bt, 128) store -------
    w3 = p_ref[r_w3:r_w3 + LANE, :]                   # (128, 128)
    b3 = p_ref[r_b3:r_b3 + 1, :]                      # (1, 128)
    out = jnp.dot(h, w3, preferred_element_type=jnp.float32) + b3
    o_ref[...] = out.astype(o_ref.dtype)              # lane-dense store


def make_xornet_forward(w1, b1, w2, b2, w3, b3, *,
                        batch_tile=512, grid_threshold=1024):
    """Builds a jitted forward(x). Parameters are packed ONCE here."""
    packed, offs = pack_params(w1, b1, w2, b2, w3, b3)
    in_size = w1.shape[0]
    out_size = w3.shape[1]
    n_rows = packed.shape[0]
    kernel = functools.partial(xornet_kernel, in_size=in_size, offs=offs)

    def _call_gridless(x):
        # Small batch (v5e/v6e default): one block, ~150 KiB of VMEM total.
        B = x.shape[0]
        return pl.pallas_call(
            kernel,
            out_shape=jax.ShapeDtypeStruct((B, LANE), jnp.float32),
            in_specs=[pl.BlockSpec(memory_space=pltpu.VMEM),
                      pl.BlockSpec(memory_space=pltpu.VMEM)],
            out_specs=pl.BlockSpec(memory_space=pltpu.VMEM),
        )(x, packed)

    def _call_gridded(x):
        # Large batch: shard batch tiles across cores (v7x has 2 TCs).
        B = x.shape[0]
        return pl.pallas_call(
            kernel,
            out_shape=jax.ShapeDtypeStruct((B, LANE), jnp.float32),
            grid_spec=pltpu.PrefetchScalarGridSpec(
                num_scalar_prefetch=0,
                grid=(pl.cdiv(B, batch_tile),),
                in_specs=[pl.BlockSpec((batch_tile, in_size),
                                       lambda i: (i, 0)),
                          pl.BlockSpec((n_rows, LANE),
                                       lambda i: (0, 0))],
                out_specs=pl.BlockSpec((batch_tile, LANE),
                                       lambda i: (i, 0))),
            compiler_params=pltpu.CompilerParams(
                dimension_semantics=("parallel",)),
        )(x, packed)

    @jax.jit
    def forward(x):
        x32 = x.astype(jnp.float32)
        if x.shape[0] >= grid_threshold:
            out_pad = _call_gridded(x32)
        else:
            out_pad = _call_gridless(x32)
        return out_pad[:, :out_size].astype(x.dtype)

    return forward


def init_params(key, input_size, hidden_size_1, hidden_size_2, output_size):
    """Deterministic init mirroring XorNet.__init__: weights ~ N(0,1); biases
    use nn.Linear's default uniform(-1/sqrt(fan_in), 1/sqrt(fan_in))."""
    ks = jax.random.split(key, 6)
    w1 = jax.random.normal(ks[0], (input_size, hidden_size_1), jnp.float32)
    w2 = jax.random.normal(ks[1], (hidden_size_1, hidden_size_2), jnp.float32)
    w3 = jax.random.normal(ks[2], (hidden_size_2, output_size), jnp.float32)
    b1 = jax.random.uniform(ks[3], (1, hidden_size_1), jnp.float32,
                            -1.0 / input_size ** 0.5, 1.0 / input_size ** 0.5)
    b2 = jax.random.uniform(ks[4], (1, hidden_size_2), jnp.float32,
                            -1.0 / hidden_size_1 ** 0.5, 1.0 / hidden_size_1 ** 0.5)
    b3 = jax.random.uniform(ks[5], (1, output_size), jnp.float32,
                            -1.0 / hidden_size_2 ** 0.5, 1.0 / hidden_size_2 ** 0.5)
    return w1, b1, w2, b2, w3, b3


def _reference(x, w1, b1, w2, b2, w3, b3):
    h1 = jax.nn.sigmoid(x @ w1 + b1)
    h2 = jax.nn.sigmoid(h1 @ w2 + b2)
    return h2 @ w3 + b3


if __name__ == "__main__":
    # XOR-style problem sizes: 2 inputs, two hidden layers of 32, 1 output.
    input_size, hidden_1, hidden_2, output_size = 2, 32, 32, 1

    key = jax.random.PRNGKey(0)
    k_x, k_x2, k_p = jax.random.split(key, 3)
    w1, b1, w2, b2, w3, b3 = init_params(k_p, input_size, hidden_1, hidden_2,
                                         output_size)

    # Parameters are packed once here, not per call.
    forward = make_xornet_forward(w1, b1, w2, b2, w3, b3,
                                  batch_tile=512, grid_threshold=1024)

    # --- Small batch: gridless single-block path ----------------------------
    batch = 8
    x = jax.random.normal(k_x, (batch, input_size), jnp.float32)
    out = jax.block_until_ready(forward(x))
    ref = _reference(x, w1, b1, w2, b2, w3, b3)
    assert out.shape == (batch, output_size)
    assert jnp.allclose(out, ref, atol=1e-5, rtol=1e-5)

    # --- Large batch: parallel batch-grid path (v7x megacore sharding) ------
    big_batch = 1024
    x_big = jax.random.normal(k_x2, (big_batch, input_size), jnp.float32)
    out_big = jax.block_until_ready(forward(x_big))
    ref_big = _reference(x_big, w1, b1, w2, b2, w3, b3)
    assert out_big.shape == (big_batch, output_size)
    assert jnp.allclose(out_big, ref_big, atol=1e-4, rtol=1e-4)

    print("KERNEL_OK")
</pallas_src>

<mosaic_0001>
module attributes {stable_mosaic.version = 11 : i64} {
  func.func @xornet_kernel(%arg0: memref<8x2xf32, #tpu.memory_space<vmem>>, %arg1: memref<288x128xf32, #tpu.memory_space<vmem>>, %arg2: memref<8x128xf32, #tpu.memory_space<vmem>>) attributes {dimension_semantics = [], scalar_prefetch = 0 : i64, scratch_operands = 0 : i64, tpu.core_type = #tpu.core_type<tc>} {
    %c0 = arith.constant 0 : index
    %c0_0 = arith.constant 0 : index
    %0 = vector.load %arg0[%c0, %c0_0] : memref<8x2xf32, #tpu.memory_space<vmem>>, vector<8x2xf32>
    %c8 = arith.constant 8 : index
    %c0_1 = arith.constant 0 : index
    %1 = vector.load %arg1[%c8, %c0_1] : memref<288x128xf32, #tpu.memory_space<vmem>>, vector<1x128xf32>
    %2 = vector.extract_strided_slice %0 {offsets = [0, 0], sizes = [8, 1], strides = [1, 1]} : vector<8x2xf32> to vector<8x1xf32>
    %c0_2 = arith.constant 0 : index
    %c0_3 = arith.constant 0 : index
    %3 = vector.load %arg1[%c0_2, %c0_3] : memref<288x128xf32, #tpu.memory_space<vmem>>, vector<1x128xf32>
    %4 = vector.broadcast %2 : vector<8x1xf32> to vector<8x128xf32>
    %5 = vector.broadcast %3 : vector<1x128xf32> to vector<8x128xf32>
    %6 = arith.mulf %4, %5 : vector<8x128xf32>
    %7 = vector.broadcast %1 : vector<1x128xf32> to vector<8x128xf32>
    %8 = arith.addf %7, %6 : vector<8x128xf32>
    %9 = vector.extract_strided_slice %0 {offsets = [0, 1], sizes = [8, 1], strides = [1, 1]} : vector<8x2xf32> to vector<8x1xf32>
    %c1 = arith.constant 1 : index
    %c0_4 = arith.constant 0 : index
    %10 = vector.load %arg1[%c1, %c0_4] : memref<288x128xf32, #tpu.memory_space<vmem>>, vector<1x128xf32>
    %11 = vector.broadcast %9 : vector<8x1xf32> to vector<8x128xf32>
    %12 = vector.broadcast %10 : vector<1x128xf32> to vector<8x128xf32>
    %13 = arith.mulf %11, %12 : vector<8x128xf32>
    %14 = arith.addf %8, %13 : vector<8x128xf32>
    %15 = arith.negf %14 : vector<8x128xf32>
    %16 = math.exp %15 : vector<8x128xf32>
    %cst = arith.constant 1.000000e+00 : f32
    %17 = vector.broadcast %cst : f32 to vector<8x128xf32>
    %18 = arith.addf %17, %16 : vector<8x128xf32>
    %19 = arith.divf %17, %18 : vector<8x128xf32>
    %c16 = arith.constant 16 : index
    %c0_5 = arith.constant 0 : index
    %20 = vector.load %arg1[%c16, %c0_5] : memref<288x128xf32, #tpu.memory_space<vmem>>, vector<128x128xf32>
    %c144 = arith.constant 144 : index
    %c0_6 = arith.constant 0 : index
    %21 = vector.load %arg1[%c144, %c0_6] : memref<288x128xf32, #tpu.memory_space<vmem>>, vector<1x128xf32>
    %cst_7 = arith.constant dense<0.000000e+00> : vector<8x128xf32>
    %22 = tpu.matmul %19, %20, %cst_7 {dimension_numbers = #tpu.dot_dimension_numbers<[1], [0], [0], [1], [0, 0, 1, 1], [], []>} : vector<8x128xf32>, vector<128x128xf32>, vector<8x128xf32> -> vector<8x128xf32>
    %23 = vector.broadcast %21 : vector<1x128xf32> to vector<8x128xf32>
    %24 = arith.addf %22, %23 : vector<8x128xf32>
    %25 = arith.negf %24 : vector<8x128xf32>
    %26 = math.exp %25 : vector<8x128xf32>
    %cst_8 = arith.constant 1.000000e+00 : f32
    %27 = vector.broadcast %cst_8 : f32 to vector<8x128xf32>
    %28 = arith.addf %27, %26 : vector<8x128xf32>
    %29 = arith.divf %27, %28 : vector<8x128xf32>
    %c152 = arith.constant 152 : index
    %c0_9 = arith.constant 0 : index
    %30 = vector.load %arg1[%c152, %c0_9] : memref<288x128xf32, #tpu.memory_space<vmem>>, vector<128x128xf32>
    %c280 = arith.constant 280 : index
    %c0_10 = arith.constant 0 : index
    %31 = vector.load %arg1[%c280, %c0_10] : memref<288x128xf32, #tpu.memory_space<vmem>>, vector<1x128xf32>
    %cst_11 = arith.constant dense<0.000000e+00> : vector<8x128xf32>
    %32 = tpu.matmul %29, %30, %cst_11 {dimension_numbers = #tpu.dot_dimension_numbers<[1], [0], [0], [1], [0, 0, 1, 1], [], []>} : vector<8x128xf32>, vector<128x128xf32>, vector<8x128xf32> -> vector<8x128xf32>
    %33 = vector.broadcast %31 : vector<1x128xf32> to vector<8x128xf32>
    %34 = arith.addf %32, %33 : vector<8x128xf32>
    %c0_12 = arith.constant 0 : index
    %c0_13 = arith.constant 0 : index
    %35 = vector.load %arg2[%c0_12, %c0_13] : memref<8x128xf32, #tpu.memory_space<vmem>>, vector<8x128xf32>
    tpu.vector_store %arg2[%c0_12, %c0_13], %34 {strides = array<i32>} : memref<8x128xf32, #tpu.memory_space<vmem>>, vector<8x128xf32>,
    return
  }
}

</mosaic_0001>

<llo_original>
// kernel: forward.1
$region0: #{forward.1}
  #allocation0 [shape = 'u32[]', space=smem, size = 0x4, offset = 0x4, fixed_abs, tag = 'smem constant byte address 0x4 - core index']
  #allocation1 [shape = 'u32[72,128]{1,0:T(1,128)}', space=vmem, size = 0x9000, scoped, tag = 'internal scratch']
  %s0 = inlined_call_operand.vmem [shape: f32[8,2], index: 0, kind: input, shape index: {}]
  %s1 = inlined_call_operand.hbm [shape: f32[288,128], index: 1, kind: input, shape index: {}]
  %s2 = inlined_call_operand.vmem [shape: f32[8,128], index: 2, kind: output, shape index: {}]
  %s3 = sld [smem:[#allocation0]]
  $region22: #{forward.1} parent=0
    _
  %s5 = ssub.s32 1, %s3
  %s6 = scalar_select 0, %s5, %s3
  $region1: #{forward.1} parent=0
    #allocation2 [shape = 'u8[147456]{0}', space=vmem, size = 0x24000, scoped, tag = 'input window, operand 1, single buffered']
    #allocation3 [shape = 's32[1]{0}', space=sflag, size = 0x4, scoped, tag = 'scoped memory for forward.1']
    %7 = vsyncpa [#allocation3], 0
    // Predicated region
    $region2: #{forward.1} parent=1 // pred_check
      _
    $region3: #{forward.1} parent=1 // pred_check_branch
      %9 = sbr.rel (0) target = $region5
    $region4: #{forward.1} parent=1 // pred_region
      _
    $region5: #{forward.1} parent=1 // pred_fallthru
      _
    // Predicated region
    $region6: #{forward.1} parent=1 // pred_check
      _
    $region7: #{forward.1} parent=1 // pred_check_branch
      %11 = sbr.rel (0) target = $region9
    $region8: #{forward.1} parent=1 // pred_region
      %13 = vsyncadd [#allocation3], 0
      %s14 = sshll.u32 %s1, 4
      %s15 = int_to_ptr.hbm [resolvable:$true] %s14
      %s16 = sshll.u32 [#allocation2], 4
      %s17 = int_to_ptr.vmem [resolvable:$true] %s16
      %22 = dma.hbm_to_vmem [thread:$0]  %s15, 4608, %s17, [#allocation3], 128, 128, 8
    $region9: #{forward.1} parent=1 // pred_fallthru
      _
    // Predicated region
    $region10: #{forward.1} parent=1 // pred_check
      _
    $region11: #{forward.1} parent=1 // pred_check_branch
      %24 = sbr.rel (0) target = $region13
    $region12: #{forward.1} parent=1 // pred_region
      %26 = dma.done [#allocation3], 4608
    $region13: #{forward.1} parent=1 // pred_fallthru
      _
    %v27 = vld [vmem:[%s0] sm:$0xff]
    %v28 = vld [vmem:[#allocation2 + $0x8] sm:$0x1]
    %v29 = vld [vmem:[#allocation2] sm:$0x1]
    %31 = vset.pattern.permute.xlu0 0
    %32 = vperm.xlu0 %31, %v27
    %v33 = vpop.permute.xlu0 %32
    %v35 = vperm.slane %v29, 0
    %v36 = vmul.f32 %v33, %v35
    %v37 = vperm.slane %v28, 0
    %v38 = vadd.f32 %v37, %v36
    %v39 = vld [vmem:[#allocation2 + $0x1] sm:$0x1]
    %40 = vset.pattern.permute.xlu0 1
    %41 = vperm.xlu0 %40, %v27
    %v42 = vpop.permute.xlu0 %41
    %v44 = vperm.slane %v39, 0
    %v45 = vmul.f32 %v42, %v44
    %v46 = vadd.f32 %v38, %v45
    %v47 = vxor.u32 %v46, 2147483648
    %v48 = vmul.f32 %v47, 1.442695
    %v49 = vpow.pop %v48
    %v50 = vadd.f32 %v49, 1.0
    %v51 = vrcp.pop %v50
    %v52 = vmul.f32 %v50, %v51
    %v53 = vsub.f32 1.0, %v52
    %v54 = vmul.f32 %v51, %v53
    %v55 = vadd.f32 %v51, %v54
    %vm56 = vweird.f32 %v50
    %vm57 = vweird.f32 %v51
    %vm58 = vmor %vm56, %vm57
    %v59 = vsel %vm58, %v51, %v55
    %v60 = vand.u32 2147483647, %v50
    %vm61 = vcmp.eq.f32.partialorder %v60, 8.507059e+37
    %v62 = vand.u32 %v50, 2147483648
    %v63 = vor.u32 1.1754944e-38, %v62
    %v64 = vsel %vm61, %v63, %v59
    %v65 = vmul.f32 1.0, %v64
    %v66 = vld [vmem:[#allocation2 + $0x10] sm:$0xff]
    %v67 = vld [vmem:[#allocation2 + $0x18] sm:$0xff]
    %v68 = vld [vmem:[#allocation2 + $0x20] sm:$0xff]
    %v69 = vld [vmem:[#allocation2 + $0x28] sm:$0xff]
    %v70 = vld [vmem:[#allocation2 + $0x30] sm:$0xff]
    %v71 = vld [vmem:[#allocation2 + $0x38] sm:$0xff]
    %v72 = vld [vmem:[#allocation2 + $0x40] sm:$0xff]
    %v73 = vld [vmem:[#allocation2 + $0x48] sm:$0xff]
    %v74 = vld [vmem:[#allocation2 + $0x50] sm:$0xff]
    %v75 = vld [vmem:[#allocation2 + $0x58] sm:$0xff]
    %v76 = vld [vmem:[#allocation2 + $0x60] sm:$0xff]
    %v77 = vld [vmem:[#allocation2 + $0x68] sm:$0xff]
    %v78 = vld [vmem:[#allocation2 + $0x70] sm:$0xff]
    %v79 = vld [vmem:[#allocation2 + $0x78] sm:$0xff]
    %v80 = vld [vmem:[#allocation2 + $0x80] sm:$0xff]
    %v81 = vld [vmem:[#allocation2 + $0x88] sm:$0xff]
    %v82 = vld [vmem:[#allocation2 + $0x90] sm:$0x1]
    %v83 = vperm.slane %v82, 0
    %84 = vmatpush.msra.mxu0 %v81
    %85 = vmatpush.msra.mxu0 %v80
    %86 = vmatpush.msra.mxu0 %v79
    %87 = vmatpush.msra.mxu0 %v78
    %88 = vmatpush.msra.mxu0 %v77
    %89 = vmatpush.msra.mxu0 %v76
    %90 = vmatpush.msra.mxu0 %v75
    %91 = vmatpush.msra.mxu0 %v74
    %92 = vmatpush.msra.mxu0 %v73
    %93 = vmatpush.msra.mxu0 %v72
    %94 = vmatpush.msra.mxu0 %v71
    %95 = vmatpush.msra.mxu0 %v70
    %96 = vmatpush.msra.mxu0 %v69
    %97 = vmatpush.msra.mxu0 %v68
    %98 = vmatpush.msra.mxu0 %v67
    %99 = vmatpush.msra.mxu0 %v66
    %100 = vmatmul.f32.gmra.mxu0 %v65
    %v101 = vpop.f32.mrf.mxu0
    %v102 = vadd.f32 %v83, %v101
    %103 = vdwg.mxu0
    %v104 = vxor.u32 %v102, 2147483648
    %v105 = vmul.f32 %v104, 1.442695
    %v106 = vpow.pop %v105
    %v107 = vadd.f32 %v106, 1.0
    %v108 = vrcp.pop %v107
    %v109 = vmul.f32 %v107, %v108
    %v110 = vsub.f32 1.0, %v109
    %v111 = vmul.f32 %v108, %v110
    %v112 = vadd.f32 %v108, %v111
    %vm113 = vweird.f32 %v107
    %vm114 = vweird.f32 %v108
    %vm115 = vmor %vm113, %vm114
    %v116 = vsel %vm115, %v108, %v112
    %v117 = vand.u32 2147483647, %v107
    %vm118 = vcmp.eq.f32.partialorder %v117, 8.507059e+37
    %v119 = vand.u32 %v107, 2147483648
    %v120 = vor.u32 1.1754944e-38, %v119
    %v121 = vsel %vm118, %v120, %v116
    %v122 = vmul.f32 1.0, %v121
    %v123 = vld [vmem:[#allocation2 + $0x98] sm:$0xff]
    %v124 = vld [vmem:[#allocation2 + $0xa0] sm:$0xff]
    %v125 = vld [vmem:[#allocation2 + $0xa8] sm:$0xff]
    %v126 = vld [vmem:[#allocation2 + $0xb0] sm:$0xff]
    %v127 = vld [vmem:[#allocation2 + $0xb8] sm:$0xff]
    %v128 = vld [vmem:[#allocation2 + $0xc0] sm:$0xff]
    %v129 = vld [vmem:[#allocation2 + $0xc8] sm:$0xff]
    %v130 = vld [vmem:[#allocation2 + $0xd0] sm:$0xff]
    %v131 = vld [vmem:[#allocation2 + $0xd8] sm:$0xff]
    %v132 = vld [vmem:[#allocation2 + $0xe0] sm:$0xff]
    %v133 = vld [vmem:[#allocation2 + $0xe8] sm:$0xff]
    %v134 = vld [vmem:[#allocation2 + $0xf0] sm:$0xff]
    %v135 = vld [vmem:[#allocation2 + $0xf8] sm:$0xff]
    %v136 = vld [vmem:[#allocation2 + $0x100] sm:$0xff]
    %v137 = vld [vmem:[#allocation2 + $0x108] sm:$0xff]
    %v138 = vld [vmem:[#allocation2 + $0x110] sm:$0xff]
    %v139 = vld [vmem:[#allocation2 + $0x118] sm:$0x1]
    %v140 = vperm.slane %v139, 0
    %141 = vmatpush.msra.mxu0 %v138
    %142 = vmatpush.msra.mxu0 %v137
    %143 = vmatpush.msra.mxu0 %v136
    %144 = vmatpush.msra.mxu0 %v135
    %145 = vmatpush.msra.mxu0 %v134
    %146 = vmatpush.msra.mxu0 %v133
    %147 = vmatpush.msra.mxu0 %v132
    %148 = vmatpush.msra.mxu0 %v131
    %149 = vmatpush.msra.mxu0 %v130
    %150 = vmatpush.msra.mxu0 %v129
    %151 = vmatpush.msra.mxu0 %v128
    %152 = vmatpush.msra.mxu0 %v127
    %153 = vmatpush.msra.mxu0 %v126
    %154 = vmatpush.msra.mxu0 %v125
    %155 = vmatpush.msra.mxu0 %v124
    %156 = vmatpush.msra.mxu0 %v123
    %157 = vmatmul.f32.gmra.mxu0 %v122
    %v158 = vpop.f32.mrf.mxu0
    %v159 = vadd.f32 %v140, %v158
    %160 = vdwg.mxu0
    %161 = vst [vmem:[%s2] sm:$0xff] %v159
    // Predicated region
    $region14: #{forward.1} parent=1 // pred_check
      _
    $region15: #{forward.1} parent=1 // pred_check_branch
      %163 = sbr.rel (0) target = $region17
    $region16: #{forward.1} parent=1 // pred_region
      _
    $region17: #{forward.1} parent=1 // pred_fallthru
      _
    // Predicated region
    $region18: #{forward.1} parent=1 // pred_check
      _
    $region19: #{forward.1} parent=1 // pred_check_branch
      %165 = sbr.rel (0) target = $region21
    $region20: #{forward.1} parent=1 // pred_region
      _
    $region21: #{forward.1} parent=1 // pred_fallthru
      _
    %166 = vsyncpa [#allocation3], 1

</llo_original>
